<compile_context>
chip_gen: v6e
topology: v6e:2x2x1
jax: 0.10.0
libtpu: 0.0.40
codegen_flags: <defaults>
</compile_context>

<pallas_src>
import functools

import jax
import jax.numpy as jnp
from jax.experimental import pallas as pl
from jax.experimental.pallas import tpu as pltpu

ALPHA = 0.05
GAMMA = 4


def _round_up(x, m):
    return ((x + m - 1) // m) * m


def _focal_loss_kernel(logits_ref, tgt_ref, out_ref, ce_acc, at_acc,
                       *, n_valid, block_rows, alpha, gamma):
    pid = pl.program_id(0)
    last = pl.num_programs(0) - 1

    @pl.when(pid == 0)
    def _init():
        ce_acc[...] = jnp.zeros_like(ce_acc)
        at_acc[...] = jnp.zeros_like(at_acc)

    x = logits_ref[...].astype(jnp.float32)          # (2, R, 128)
    x0 = x[0]                                        # (R, 128) class-0 logits
    x1 = x[1]                                        # (R, 128) class-1 logits
    t = tgt_ref[...]                                 # (R, 128) int32 labels
    is_one = t != 0

    # Margin of the "other" class over the true class, then stable softplus:
    #   ce = logsumexp(x0, x1) - x_true = log(1 + exp(x_other - x_true))
    diff = x1 - x0
    d = jnp.where(is_one, -diff, diff)               # x_other - x_true
    ce_i = jnp.maximum(d, 0.0) + jnp.log(1.0 + jnp.exp(-jnp.abs(d)))
    at_i = jnp.where(is_one, 1.0 - alpha, alpha)     # alpha "gather" via select

    def accumulate(ce_v, at_v):
        # Fold (R,128) block into the fixed (8,128) accumulators: the reshape
        # splits whole (8,128) vreg tiles, sum(axis=0) is pure VPU adds.
        ce_acc[...] += ce_v.reshape(block_rows // 8, 8, 128).sum(axis=0)
        at_acc[...] += at_v.reshape(block_rows // 8, 8, 128).sum(axis=0)

    @pl.when(pid != last)
    def _interior():
        accumulate(ce_i, at_i)                       # interior blocks: no mask

    @pl.when(pid == last)
    def _finalize():
        # All padding / ragged rows live in the last block: mask with where
        # (not multiply) so garbage lanes (possibly inf/nan) are discarded.
        row = jax.lax.broadcasted_iota(jnp.int32, (block_rows, 128), 0)
        lane = jax.lax.broadcasted_iota(jnp.int32, (block_rows, 128), 1)
        idx = (pid * block_rows + row) * 128 + lane
        valid = idx < n_valid
        accumulate(jnp.where(valid, ce_i, 0.0), jnp.where(valid, at_i, 0.0))

        inv_n = 1.0 / float(n_valid)
        ce = jnp.sum(ce_acc[...]) * inv_n            # == torch mean CE
        at_mean = jnp.sum(at_acc[...]) * inv_n
        pt = jnp.exp(-ce)
        out_ref[0, 0] = at_mean * (1.0 - pt) ** gamma * ce


def weighted_focal_loss(inputs, targets, alpha=ALPHA, gamma=GAMMA,
                        block_rows=4096):
    """inputs: (N, 2) float logits. targets: (N,) int labels in {0, 1}."""
    n, c = inputs.shape
    if c != 2:
        raise ValueError("WeightedFocalLoss is binary: expected C == 2")

    # Lane-dense layout: 128 samples per lane-row, classes stacked on a
    # leading axis of 2. Keep the row count a multiple of 8 so every block is
    # a whole number of (8,128) tiles.
    n_pad = _round_up(n, 128)
    if (n_pad // 128) % 8 != 0:
        n_pad = _round_up(n, 8 * 128)
    nr = n_pad // 128

    logits_cm = inputs.T                                     # (2, N), keep dtype
    if targets.dtype != jnp.int32:
        targets = targets.astype(jnp.int32)
    tgt = targets
    if n_pad != n:
        logits_cm = jnp.pad(logits_cm, ((0, 0), (0, n_pad - n)))
        tgt = jnp.pad(tgt, (0, n_pad - n))
    logits3 = logits_cm.reshape(2, nr, 128)                  # (2, Nr, 128)
    tgt2 = tgt.reshape(nr, 128)                              # (Nr, 128) int32

    r = min(_round_up(int(block_rows), 8), nr)               # rows per block
    grid_r = pl.cdiv(nr, r)

    kernel = functools.partial(
        _focal_loss_kernel,
        n_valid=n, block_rows=r, alpha=float(alpha), gamma=int(gamma))

    bytes_accessed = (int(logits3.size) * logits3.dtype.itemsize
                      + int(tgt2.size) * 4 + 4)

    out = pl.pallas_call(
        kernel,
        out_shape=jax.ShapeDtypeStruct((1, 1), jnp.float32),
        grid_spec=pltpu.PrefetchScalarGridSpec(
            num_scalar_prefetch=0,
            grid=(grid_r,),
            in_specs=[
                pl.BlockSpec((2, r, 128), lambda i: (0, i, 0)),
                pl.BlockSpec((r, 128), lambda i: (i, 0)),
            ],
            out_specs=pl.BlockSpec(memory_space=pltpu.MemorySpace.SMEM),
            scratch_shapes=[
                pltpu.VMEM((8, 128), jnp.float32),   # running sum(ce) per lane
                pltpu.VMEM((8, 128), jnp.float32),   # running sum(at) per lane
            ],
        ),
        compiler_params=pltpu.CompilerParams(
            dimension_semantics=("arbitrary",),
            vmem_limit_bytes=32 * 1024 * 1024,
        ),
        cost_estimate=pl.CostEstimate(
            flops=10 * n_pad,
            transcendentals=2 * n_pad,
            bytes_accessed=int(bytes_accessed),
        ),
    )(logits3, tgt2)
    return out[0, 0]


def _reference(inputs, targets, alpha=ALPHA, gamma=GAMMA):
    # pure-JAX reference mirroring the torch module
    logp = jax.nn.log_softmax(inputs.astype(jnp.float32), axis=-1)
    ce_i = -jnp.take_along_axis(
        logp, targets[:, None].astype(jnp.int32), axis=-1)[:, 0]
    ce = jnp.mean(ce_i)
    at = jnp.asarray([alpha, 1.0 - alpha], jnp.float32)[targets.astype(jnp.int32)]
    pt = jnp.exp(-ce)
    return jnp.mean(at * (1.0 - pt) ** gamma * ce)


if __name__ == "__main__":
    key = jax.random.PRNGKey(0)
    k1, k2, k3, k4 = jax.random.split(key, 4)

    # Small shape matching the module's usage: N test nodes, binary classes.
    N, C = 8, 2
    logits = jax.random.normal(k1, (N, C), dtype=jnp.float32)
    targets = jax.random.randint(k2, (N,), 0, C, dtype=jnp.int32)
    loss = weighted_focal_loss(logits, targets)
    jax.block_until_ready(loss)
    ref = _reference(logits, targets)
    assert jnp.allclose(loss, ref, rtol=1e-5, atol=1e-6), (loss, ref)

    # Multi-block + padded/masked-tail path: 24 rows, 8 rows/block -> 3 steps.
    N2 = 2500
    logits2 = jax.random.normal(k3, (N2, C), dtype=jnp.float32)
    targets2 = jax.random.randint(k4, (N2,), 0, C, dtype=jnp.int32)
    loss2 = weighted_focal_loss(logits2, targets2, block_rows=8)
    jax.block_until_ready(loss2)
    ref2 = _reference(logits2, targets2)
    assert jnp.allclose(loss2, ref2, rtol=1e-5, atol=1e-6), (loss2, ref2)

    print("KERNEL_OK")
</pallas_src>

<mosaic_0001>
module attributes {stable_mosaic.version = 11 : i64} {
  func.func @_focal_loss_kernel(%arg0: i32, %arg1: memref<2x8x128xf32, #tpu.memory_space<vmem>>, %arg2: memref<8x128xi32, #tpu.memory_space<vmem>>, %arg3: memref<1x1xf32, #tpu.memory_space<smem>>, %arg4: memref<8x128xf32, #tpu.memory_space<vmem>>, %arg5: memref<8x128xf32, #tpu.memory_space<vmem>>) attributes {dimension_semantics = [#tpu.dimension_semantics<arbitrary>], iteration_bounds = array<i64: 1>, scalar_prefetch = 0 : i64, scratch_operands = 2 : i64, tpu.core_type = #tpu.core_type<tc>, window_params = [{transform_indices = @transform_0, window_bounds = array<i64: 2, 8, 128>}, {transform_indices = @transform_1, window_bounds = array<i64: 8, 128>}, {transform_indices = @transform_2, window_bounds = array<i64: 1, 1>}]} {
    %c0_i32 = arith.constant 0 : i32
    %0 = arith.cmpi eq, %arg0, %c0_i32 : i32
    %1 = arith.extui %0 : i1 to i32
    %c0_i32_0 = arith.constant 0 : i32
    %2 = arith.cmpi ne, %1, %c0_i32_0 : i32
    scf.if %2 {
      %cst_15 = arith.constant 0.000000e+00 : f32
      %34 = vector.broadcast %cst_15 : f32 to vector<8x128xf32>
      %c0_16 = arith.constant 0 : index
      %c0_17 = arith.constant 0 : index
      %35 = vector.load %arg4[%c0_16, %c0_17] : memref<8x128xf32, #tpu.memory_space<vmem>>, vector<8x128xf32>
      tpu.vector_store %arg4[%c0_16, %c0_17], %34 {strides = array<i32>} : memref<8x128xf32, #tpu.memory_space<vmem>>, vector<8x128xf32>,
      %cst_18 = arith.constant 0.000000e+00 : f32
      %36 = vector.broadcast %cst_18 : f32 to vector<8x128xf32>
      %c0_19 = arith.constant 0 : index
      %c0_20 = arith.constant 0 : index
      %37 = vector.load %arg5[%c0_19, %c0_20] : memref<8x128xf32, #tpu.memory_space<vmem>>, vector<8x128xf32>
      tpu.vector_store %arg5[%c0_19, %c0_20], %36 {strides = array<i32>} : memref<8x128xf32, #tpu.memory_space<vmem>>, vector<8x128xf32>,
    } else {
    }
    %c0 = arith.constant 0 : index
    %c0_1 = arith.constant 0 : index
    %c0_2 = arith.constant 0 : index
    %3 = vector.load %arg1[%c0, %c0_1, %c0_2] : memref<2x8x128xf32, #tpu.memory_space<vmem>>, vector<2x8x128xf32>
    %4 = vector.extract_strided_slice %3 {offsets = [0, 0, 0], sizes = [1, 8, 128], strides = [1, 1, 1]} : vector<2x8x128xf32> to vector<1x8x128xf32>
    %5 = vector.shape_cast %4 : vector<1x8x128xf32> to vector<8x128xf32>
    %6 = vector.extract_strided_slice %3 {offsets = [1, 0, 0], sizes = [1, 8, 128], strides = [1, 1, 1]} : vector<2x8x128xf32> to vector<1x8x128xf32>
    %7 = vector.shape_cast %6 : vector<1x8x128xf32> to vector<8x128xf32>
    %c0_3 = arith.constant 0 : index
    %c0_4 = arith.constant 0 : index
    %8 = vector.load %arg2[%c0_3, %c0_4] : memref<8x128xi32, #tpu.memory_space<vmem>>, vector<8x128xi32>
    %c0_i32_5 = arith.constant 0 : i32
    %9 = vector.broadcast %c0_i32_5 : i32 to vector<8x128xi32>
    %10 = arith.cmpi ne, %8, %9 : vector<8x128xi32>
    %11 = arith.subf %7, %5 : vector<8x128xf32>
    %cst = arith.constant 0.000000e+00 : f32
    %12 = vector.broadcast %cst : f32 to vector<8x128xf32>
    %13 = arith.subf %12, %11 : vector<8x128xf32>
    %14 = arith.select %10, %13, %11 : vector<8x128xi1>, vector<8x128xf32>
    %cst_6 = arith.constant 0.000000e+00 : f32
    %15 = vector.broadcast %cst_6 : f32 to vector<8x128xf32>
    %16 = arith.maximumf %14, %15 : vector<8x128xf32>
    %17 = math.absf %14 : vector<8x128xf32>
    %cst_7 = arith.constant 0.000000e+00 : f32
    %18 = vector.broadcast %cst_7 : f32 to vector<8x128xf32>
    %19 = arith.subf %18, %17 : vector<8x128xf32>
    %20 = math.exp %19 : vector<8x128xf32>
    %cst_8 = arith.constant 1.000000e+00 : f32
    %21 = vector.broadcast %cst_8 : f32 to vector<8x128xf32>
    %22 = arith.addf %21, %20 : vector<8x128xf32>
    %23 = math.log %22 : vector<8x128xf32>
    %24 = arith.addf %16, %23 : vector<8x128xf32>
    %cst_9 = arith.constant 0.949999988 : f32
    %cst_10 = arith.constant 5.000000e-02 : f32
    %25 = vector.broadcast %cst_9 : f32 to vector<8x128xf32>
    %26 = vector.broadcast %cst_10 : f32 to vector<8x128xf32>
    %27 = arith.select %10, %25, %26 : vector<8x128xi1>, vector<8x128xf32>
    %c0_i32_11 = arith.constant 0 : i32
    %28 = arith.cmpi ne, %arg0, %c0_i32_11 : i32
    %29 = arith.extui %28 : i1 to i32
    %c0_i32_12 = arith.constant 0 : i32
    %30 = arith.cmpi ne, %29, %c0_i32_12 : i32
    scf.if %30 {
      %c0_15 = arith.constant 0 : index
      %c0_16 = arith.constant 0 : index
      %34 = vector.load %arg4[%c0_15, %c0_16] : memref<8x128xf32, #tpu.memory_space<vmem>>, vector<8x128xf32>
      %35 = vector.shape_cast %24 : vector<8x128xf32> to vector<1x8x128xf32>
      %cst_17 = arith.constant dense<0.000000e+00> : vector<8x128xf32>
      %36 = vector.multi_reduction <add>, %35, %cst_17 [0] : vector<1x8x128xf32> to vector<8x128xf32>
      %37 = arith.addf %34, %36 : vector<8x128xf32>
      %c0_18 = arith.constant 0 : index
      %c0_19 = arith.constant 0 : index
      %38 = vector.load %arg4[%c0_18, %c0_19] : memref<8x128xf32, #tpu.memory_space<vmem>>, vector<8x128xf32>
      tpu.vector_store %arg4[%c0_18, %c0_19], %37 {strides = array<i32>} : memref<8x128xf32, #tpu.memory_space<vmem>>, vector<8x128xf32>,
      %c0_20 = arith.constant 0 : index
      %c0_21 = arith.constant 0 : index
      %39 = vector.load %arg5[%c0_20, %c0_21] : memref<8x128xf32, #tpu.memory_space<vmem>>, vector<8x128xf32>
      %40 = vector.shape_cast %27 : vector<8x128xf32> to vector<1x8x128xf32>
      %cst_22 = arith.constant dense<0.000000e+00> : vector<8x128xf32>
      %41 = vector.multi_reduction <add>, %40, %cst_22 [0] : vector<1x8x128xf32> to vector<8x128xf32>
      %42 = arith.addf %39, %41 : vector<8x128xf32>
      %c0_23 = arith.constant 0 : index
      %c0_24 = arith.constant 0 : index
      %43 = vector.load %arg5[%c0_23, %c0_24] : memref<8x128xf32, #tpu.memory_space<vmem>>, vector<8x128xf32>
      tpu.vector_store %arg5[%c0_23, %c0_24], %42 {strides = array<i32>} : memref<8x128xf32, #tpu.memory_space<vmem>>, vector<8x128xf32>,
    } else {
    }
    %c0_i32_13 = arith.constant 0 : i32
    %31 = arith.cmpi eq, %arg0, %c0_i32_13 : i32
    %32 = arith.extui %31 : i1 to i32
    %c0_i32_14 = arith.constant 0 : i32
    %33 = arith.cmpi ne, %32, %c0_i32_14 : i32
    scf.if %33 {
      %34 = tpu.iota {dimensions = array<i32: 0>} : vector<8x128xi32>
      %35 = tpu.iota {dimensions = array<i32: 1>} : vector<8x128xi32>
      %c8_i32 = arith.constant 8 : i32
      %36 = arith.muli %arg0, %c8_i32 : i32
      %37 = vector.broadcast %36 : i32 to vector<8x128xi32>
      %38 = arith.addi %37, %34 : vector<8x128xi32>
      %c128_i32 = arith.constant 128 : i32
      %39 = vector.broadcast %c128_i32 : i32 to vector<8x128xi32>
      %40 = arith.muli %38, %39 : vector<8x128xi32>
      %41 = arith.addi %40, %35 : vector<8x128xi32>
      %c8_i32_15 = arith.constant 8 : i32
      %42 = vector.broadcast %c8_i32_15 : i32 to vector<8x128xi32>
      %43 = arith.cmpi slt, %41, %42 : vector<8x128xi32>
      %cst_16 = arith.constant 0.000000e+00 : f32
      %44 = vector.broadcast %cst_16 : f32 to vector<8x128xf32>
      %45 = arith.select %43, %24, %44 : vector<8x128xi1>, vector<8x128xf32>
      %cst_17 = arith.constant 0.000000e+00 : f32
      %46 = vector.broadcast %cst_17 : f32 to vector<8x128xf32>
      %47 = arith.select %43, %27, %46 : vector<8x128xi1>, vector<8x128xf32>
      %c0_18 = arith.constant 0 : index
      %c0_19 = arith.constant 0 : index
      %48 = vector.load %arg4[%c0_18, %c0_19] : memref<8x128xf32, #tpu.memory_space<vmem>>, vector<8x128xf32>
      %49 = vector.shape_cast %45 : vector<8x128xf32> to vector<1x8x128xf32>
      %cst_20 = arith.constant dense<0.000000e+00> : vector<8x128xf32>
      %50 = vector.multi_reduction <add>, %49, %cst_20 [0] : vector<1x8x128xf32> to vector<8x128xf32>
      %51 = arith.addf %48, %50 : vector<8x128xf32>
      %c0_21 = arith.constant 0 : index
      %c0_22 = arith.constant 0 : index
      %52 = vector.load %arg4[%c0_21, %c0_22] : memref<8x128xf32, #tpu.memory_space<vmem>>, vector<8x128xf32>
      tpu.vector_store %arg4[%c0_21, %c0_22], %51 {strides = array<i32>} : memref<8x128xf32, #tpu.memory_space<vmem>>, vector<8x128xf32>,
      %c0_23 = arith.constant 0 : index
      %c0_24 = arith.constant 0 : index
      %53 = vector.load %arg5[%c0_23, %c0_24] : memref<8x128xf32, #tpu.memory_space<vmem>>, vector<8x128xf32>
      %54 = vector.shape_cast %47 : vector<8x128xf32> to vector<1x8x128xf32>
      %cst_25 = arith.constant dense<0.000000e+00> : vector<8x128xf32>
      %55 = vector.multi_reduction <add>, %54, %cst_25 [0] : vector<1x8x128xf32> to vector<8x128xf32>
      %56 = arith.addf %53, %55 : vector<8x128xf32>
      %c0_26 = arith.constant 0 : index
      %c0_27 = arith.constant 0 : index
      %57 = vector.load %arg5[%c0_26, %c0_27] : memref<8x128xf32, #tpu.memory_space<vmem>>, vector<8x128xf32>
      tpu.vector_store %arg5[%c0_26, %c0_27], %56 {strides = array<i32>} : memref<8x128xf32, #tpu.memory_space<vmem>>, vector<8x128xf32>,
      %c0_28 = arith.constant 0 : index
      %c0_29 = arith.constant 0 : index
      %58 = vector.load %arg4[%c0_28, %c0_29] : memref<8x128xf32, #tpu.memory_space<vmem>>, vector<8x128xf32>
      %59 = vector.shape_cast %58 : vector<8x128xf32> to vector<1x8x128xf32>
      %cst_30 = arith.constant dense<0.000000e+00> : vector<1xf32>
      %60 = vector.multi_reduction <add>, %59, %cst_30 [1, 2] : vector<1x8x128xf32> to vector<1xf32>
      %61 = vector.shape_cast %60 : vector<1xf32> to vector<1x1x1xf32>
      %62 = vector.extract %61[0, 0, 0] : f32 from vector<1x1x1xf32>
      %cst_31 = arith.constant 1.250000e-01 : f32
      %63 = arith.mulf %62, %cst_31 : f32
      %c0_32 = arith.constant 0 : index
      %c0_33 = arith.constant 0 : index
      %64 = vector.load %arg5[%c0_32, %c0_33] : memref<8x128xf32, #tpu.memory_space<vmem>>, vector<8x128xf32>
      %65 = vector.shape_cast %64 : vector<8x128xf32> to vector<1x8x128xf32>
      %cst_34 = arith.constant dense<0.000000e+00> : vector<1xf32>
      %66 = vector.multi_reduction <add>, %65, %cst_34 [1, 2] : vector<1x8x128xf32> to vector<1xf32>
      %67 = vector.shape_cast %66 : vector<1xf32> to vector<1x1x1xf32>
      %68 = vector.extract %67[0, 0, 0] : f32 from vector<1x1x1xf32>
      %cst_35 = arith.constant 1.250000e-01 : f32
      %69 = arith.mulf %68, %cst_35 : f32
      %cst_36 = arith.constant 0.000000e+00 : f32
      %70 = arith.subf %cst_36, %63 : f32
      %71 = math.exp %70 : f32
      %cst_37 = arith.constant 1.000000e+00 : f32
      %72 = arith.subf %cst_37, %71 : f32
      %73 = arith.mulf %72, %72 : f32
      %74 = arith.mulf %73, %73 : f32
      %75 = arith.mulf %69, %74 : f32
      %76 = arith.mulf %75, %63 : f32
      %c0_38 = arith.constant 0 : index
      %c0_39 = arith.constant 0 : index
      %77 = memref.load %arg3[%c0_38, %c0_39] : memref<1x1xf32, #tpu.memory_space<smem>>
      memref.store %76, %arg3[%c0_38, %c0_39] : memref<1x1xf32, #tpu.memory_space<smem>>
    } else {
    }
    return
  }
  func.func @transform_0(%arg0: i32) -> (i32, i32, i32) {
    %c0_i32 = arith.constant 0 : i32
    %c0_i32_0 = arith.constant 0 : i32
    %c0_i32_1 = arith.constant 0 : i32
    return %c0_i32, %arg0, %c0_i32_0 : i32, i32, i32
  }
  func.func @transform_1(%arg0: i32) -> (i32, i32) {
    %c0_i32 = arith.constant 0 : i32
    %c0_i32_0 = arith.constant 0 : i32
    return %arg0, %c0_i32 : i32, i32
  }
  func.func @transform_2(%arg0: i32) -> (i32, i32) {
    %c0_i32 = arith.constant 0 : i32
    %c0_i32_0 = arith.constant 0 : i32
    %c0_i32_1 = arith.constant 0 : i32
    return %c0_i32, %c0_i32_0 : i32, i32
  }
}

</mosaic_0001>

<llo_original>
// kernel: tpu_custom_call.1
$region0: #{tpu_custom_call.1}
  #allocation0 [shape = 'u32[]', space=smem, size = 0x4, offset = 0x4, fixed_abs, tag = 'smem constant byte address 0x4 - core index']
  #allocation1 [shape = 'u32[144,128]{1,0:T(1,128)}', space=vmem, size = 0x12000, scoped, tag = 'internal scratch']
  #allocation2 [shape = 'f32[8,128]{1,0:T(8,128)}', space=vmem, size = 0x1000, scoped, tag = 'scratch operand']
  #allocation3 [shape = 'f32[8,128]{1,0:T(8,128)}', space=vmem, size = 0x1000, scoped, tag = 'scratch operand']
  %s0 = inlined_call_operand.hbm [shape: f32[2,8,128], index: 0, kind: input, shape index: {}]
  %s1 = inlined_call_operand.hbm [shape: s32[8,128], index: 1, kind: input, shape index: {}]
  %s2 = inlined_call_operand.hbm [shape: f32[1,1], index: 2, kind: output, shape index: {}]
  %s3 = sld [smem:[#allocation0]]
  $region38: #{tpu_custom_call.1} parent=0
    _
  %s5 = ssub.s32 1, %s3
  %s6 = scalar_select 0, %s5, %s3
  $region1: #{tpu_custom_call.1} parent=0
    #allocation4 [shape = 'u8[8192]{0}', space=vmem, size = 0x2000, scoped, tag = 'input window, operand 0, single buffered']
    #allocation5 [shape = 's32[1]{0}', space=sflag, size = 0x4, scoped, tag = 'scoped memory for tpu_custom_call.1']
    #allocation6 [shape = 's32[1]{0}', space=sflag, size = 0x4, scoped, tag = 'scoped memory for tpu_custom_call.1']
    #allocation7 [shape = 'u8[4096]{0}', space=vmem, size = 0x1000, scoped, tag = 'input window, operand 1, single buffered']
    #allocation8 [shape = 's32[1]{0}', space=sflag, size = 0x4, scoped, tag = 'scoped memory for tpu_custom_call.1']
    #allocation9 [shape = 'u8[512]{0}', space=smem, size = 0x200, scoped, tag = 'output window, operand 0, single buffered']
    %7 = vsyncpa [#allocation5], 0
    %8 = vsyncpa [#allocation8], 0
    %9 = vsyncpa [#allocation6], 0
    // Predicated region
    $region2: #{tpu_custom_call.1} parent=1 // pred_check
      _
    $region3: #{tpu_custom_call.1} parent=1 // pred_check_branch
      %11 = sbr.rel (0) target = $region5
    $region4: #{tpu_custom_call.1} parent=1 // pred_region
      %s13 = ssub.s32 256, 256
      %14 = vsyncadd [#allocation5], %s13
      %s15 = sshll.u32 [#allocation4], 4
      %s16 = int_to_ptr.vmem [resolvable:$true] %s15
      %21 = dma.hbm_to_vmem [thread:$0]  %s0, 256, %s16, [#allocation5], 128, 128, 8
    $region5: #{tpu_custom_call.1} parent=1 // pred_fallthru
      _
    // Predicated region
    $region6: #{tpu_custom_call.1} parent=1 // pred_check
      _
    $region7: #{tpu_custom_call.1} parent=1 // pred_check_branch
      %23 = sbr.rel (0) target = $region9
    $region8: #{tpu_custom_call.1} parent=1 // pred_region
      %s25 = ssub.s32 128, 128
      %26 = vsyncadd [#allocation8], %s25
      %s28 = sshll.u32 [#allocation7], 4
      %s29 = int_to_ptr.vmem [resolvable:$true] %s28
      %31 = dma.hbm_to_vmem [thread:$0]  %s1, 128, %s29, [#allocation8]
    $region9: #{tpu_custom_call.1} parent=1 // pred_fallthru
      _
    // Predicated region
    $region10: #{tpu_custom_call.1} parent=1 // pred_check
      _
    $region11: #{tpu_custom_call.1} parent=1 // pred_check_branch
      %33 = sbr.rel (0) target = $region13
    $region12: #{tpu_custom_call.1} parent=1 // pred_region
      %34 = dma.done [#allocation5], 256
    $region13: #{tpu_custom_call.1} parent=1 // pred_fallthru
      _
    // Predicated region
    $region14: #{tpu_custom_call.1} parent=1 // pred_check
      _
    $region15: #{tpu_custom_call.1} parent=1 // pred_check_branch
      %36 = sbr.rel (0) target = $region17
    $region16: #{tpu_custom_call.1} parent=1 // pred_region
      %37 = dma.done [#allocation8], 128
    $region17: #{tpu_custom_call.1} parent=1 // pred_fallthru
      _
    %p38 = scmp.eq.s32.totalorder 0, 0
    // Predicated region
    $region18: #{tpu_custom_call.1} parent=1 // pred_check
      %p39 = pneg %p38
    $region19: #{tpu_custom_call.1} parent=1 // pred_check_branch
      %41 = sbr.rel (%p39) target = $region21
    $region20: #{tpu_custom_call.1} parent=1 // pred_region
      %42 = vst [vmem:[#allocation2] sm:$0xff] 0.0
      %43 = vst [vmem:[#allocation3] sm:$0xff] 0.0
    $region21: #{tpu_custom_call.1} parent=1 // pred_fallthru
      _
    %v44 = vld [vmem:[#allocation4] sm:$0xff]
    %v45 = vld [vmem:[#allocation4 + $0x8] sm:$0xff]
    %v46 = vld [vmem:[#allocation7] sm:$0xff]
    %vm47 = vcmp.ne.s32.totalorder %v46, 0
    %v48 = vsub.f32 %v45, %v44
    %v49 = vsub.f32 0.0, %v48
    %v50 = vsel %vm47, %v49, %v48
    %v51 = vmax.f32 %v50, 0.0
    %v52 = vand.u32 2147483647, %v50
    %v53 = vsub.f32 0.0, %v52
    %v54 = vmul.f32 %v53, 1.442695
    %v55 = vpow.pop %v54
    %v56 = vadd.f32 %v55, 1.0
    %v57 = vlog2.pop %v56
    %v58 = vmul.f32 %v57, 0.6931472
    %v59 = vadd.f32 %v51, %v58
    %v60 = vsel %vm47, 0.95, 0.05
    %p61 = scmp.ne.s32.totalorder 0, 0
    // Predicated region
    $region22: #{tpu_custom_call.1} parent=1 // pred_check
      %p62 = pneg %p61
    $region23: #{tpu_custom_call.1} parent=1 // pred_check_branch
      %64 = sbr.rel (%p62) target = $region25
    $region24: #{tpu_custom_call.1} parent=1 // pred_region
      %v65 = vld [vmem:[#allocation2] sm:$0xff]
      %v66 = vadd.f32 %v59, 0.0
      %v67 = vadd.f32 %v65, %v66
      %68 = vst [vmem:[#allocation2] sm:$0xff] %v67
      %v69 = vld [vmem:[#allocation3] sm:$0xff]
      %v70 = vadd.f32 %v60, 0.0
      %v71 = vadd.f32 %v69, %v70
      %72 = vst [vmem:[#allocation3] sm:$0xff] %v71
    $region25: #{tpu_custom_call.1} parent=1 // pred_fallthru
      _
    // Predicated region
    $region26: #{tpu_custom_call.1} parent=1 // pred_check
      %p73 = pneg %p38
    $region27: #{tpu_custom_call.1} parent=1 // pred_check_branch
      %75 = sbr.rel (%p73) target = $region29
    $region28: #{tpu_custom_call.1} parent=1 // pred_region
      %v76 = vlaneseq
      %v77 = vshrl.u32 %v76, 7
      %v78 = vlaneseq
      %v79 = vand.u32 %v78, 127
      %s80 = smul.u32 0, 8
      %v81 = vstv %s80
      %v82 = vadd.s32 %v81, %v77
      %v83 = vmul.u32 %v82, 128
      %v84 = vadd.s32 %v83, %v79
      %vm85 = vcmp.lt.s32.totalorder %v84, 8
      %v86 = vsel %vm85, %v59, 0.0
      %v87 = vsel %vm85, %v60, 0.0
      %v88 = vld [vmem:[#allocation2] sm:$0xff]
      %v89 = vadd.f32 %v86, 0.0
      %v90 = vadd.f32 %v88, %v89
      %91 = vst [vmem:[#allocation2] sm:$0xff] %v90
      %v92 = vld [vmem:[#allocation3] sm:$0xff]
      %v93 = vadd.f32 %v87, 0.0
      %v94 = vadd.f32 %v92, %v93
      %95 = vst [vmem:[#allocation3] sm:$0xff] %v94
      %v96 = vld [vmem:[#allocation2] sm:$0xff]
      %97 = vadd.xlane.f32.xlu0 %v96
      %v98 = vpop.xlane.xlu0 %97
      %v99 = vrot.slane %v98, 4
      %v100 = vadd.f32 %v98, %v99
      %v101 = vrot.slane %v100, 2
      %v102 = vadd.f32 %v100, %v101
      %v103 = vrot.slane %v102, 1
      %v104 = vadd.f32 %v102, %v103
      %s105 = vtos %v104
      %s106 = smul.f32 %s105, 0.125
      %v107 = vld [vmem:[#allocation3] sm:$0xff]
      %108 = vadd.xlane.f32.xlu0 %v107
      %v109 = vpop.xlane.xlu0 %108
      %v110 = vrot.slane %v109, 4
      %v111 = vadd.f32 %v109, %v110
      %v112 = vrot.slane %v111, 2
      %v113 = vadd.f32 %v111, %v112
      %v114 = vrot.slane %v113, 1
      %v115 = vadd.f32 %v113, %v114
      %s116 = vtos %v115
      %s117 = smul.f32 %s116, 0.125
      %s118 = ssub.f32 0.0, %s106
      %v119 = vstv %s118
      %v120 = vmul.f32 %v119, 1.442695
      %v121 = vpow.pop %v120
      %s122 = vtos %v121
      %s123 = ssub.f32 1.0, %s122
      %s124 = smul.f32 %s123, %s123
      %s125 = smul.f32 %s124, %s124
      %s126 = smul.f32 %s117, %s125
      %s127 = smul.f32 %s126, %s106
      %s128 = scalar_lea.smem [#allocation9], 0
      %129 = sst [smem:[%s128]] %s127
    $region29: #{tpu_custom_call.1} parent=1 // pred_fallthru
      _
    // Predicated region
    $region30: #{tpu_custom_call.1} parent=1 // pred_check
      _
    $region31: #{tpu_custom_call.1} parent=1 // pred_check_branch
      %131 = sbr.rel (0) target = $region33
    $region32: #{tpu_custom_call.1} parent=1 // pred_region
      %s133 = ssub.s32 16, 16
      %134 = vsyncadd [#allocation6], %s133
      %137 = dma.smem_to_hbm [#allocation9], 16, %s2, [#allocation6]
    $region33: #{tpu_custom_call.1} parent=1 // pred_fallthru
      _
    // Predicated region
    $region34: #{tpu_custom_call.1} parent=1 // pred_check
      _
    $region35: #{tpu_custom_call.1} parent=1 // pred_check_branch
      %139 = sbr.rel (0) target = $region37
    $region36: #{tpu_custom_call.1} parent=1 // pred_region
      %140 = dma.done [#allocation6], 16
    $region37: #{tpu_custom_call.1} parent=1 // pred_fallthru
      _
    %141 = sfence
    %142 = vsyncpa [#allocation5], 1
    %143 = vsyncpa [#allocation8], 1
    %144 = vsyncpa [#allocation6], 1

</llo_original>
